<compile_context>
chip_gen: v7x
topology: tpu7x:2x2x1
jax: 0.10.0
libtpu: 0.0.40
codegen_flags: <defaults>
</compile_context>

<pallas_src>
import functools

import jax
import jax.numpy as jnp
import numpy as np
from jax.experimental import pallas as pl
from jax.experimental.pallas import tpu as pltpu

NEG_SLOPE = 0.1
BN_EPS = 1e-5


def _leaky(v):
    return jnp.where(v > 0, v, NEG_SLOPE * v)


def fire_kernel(x_ref, w_sq_ref, b_sq_ref, w_cb_ref, mask_ref, out_ref, *,
                W, is_residual):
    # x_ref:    (B, Cin, M)   f32, M = H*W (spatial flattened onto lanes)
    # w_sq_ref: (S, Cin)      bf16  squeeze weight, BN scale folded in
    # b_sq_ref: (S, 1)        f32
    # w_cb_ref: (Cout, 9*S+1) bf16  combined expand weight (+ bias column)
    # mask_ref: (9, B*M)      f32   0/1 boundary masks for the 9 taps
    # out_ref:  (B, Cout, M)  bf16
    B, _, M_img = x_ref.shape
    L = B * M_img

    # Merge the image batch onto the lane axis: (Cin, B*M).  Cheap VMEM copy,
    # no HBM transpose needed in the wrapper.
    if B == 1:
        x_f32 = x_ref[0]
    else:
        x_f32 = jnp.concatenate([x_ref[b] for b in range(B)], axis=1)

    # squeeze 1x1 conv == (S, Cin) @ (Cin, L); bf16 MXU operands, f32 accum.
    sq = jnp.dot(w_sq_ref[...], x_f32.astype(jnp.bfloat16),
                 preferred_element_type=jnp.float32)
    sq = _leaky(sq + b_sq_ref[...])                                  # (S, L) f32

    # im2col patches: 8 lane-rotations of sq (wrap-around only lands on lanes
    # whose precomputed boundary mask is zero) + center tap + a ones row that
    # carries the expand bias through the MXU -> (9*S+1, L).
    taps = []
    k = 0
    for ky in range(3):
        for kx in range(3):
            off = (ky - 1) * W + (kx - 1)
            if off == 0:
                taps.append(sq)                                      # center tap
            else:
                t = pltpu.roll(sq, (-off) % L, axis=1)
                taps.append(t * mask_ref[k:k + 1, :])
            k += 1
    taps.append(jnp.ones((1, L), jnp.float32))                       # bias row
    patches = jnp.concatenate(taps, axis=0).astype(jnp.bfloat16)     # (9*S+1, L)

    # fused expand_1x1 + expand_3x3 (+ bias): (Cout, 9*S+1) @ (9*S+1, L),
    # output comes out already concatenated in [e1, e3] channel order.
    z = jnp.dot(w_cb_ref[...], patches, preferred_element_type=jnp.float32)
    out = _leaky(z)                                                  # (Cout, L) f32

    if is_residual:
        out = out + x_f32                                            # f32 add
    out = out.astype(out_ref.dtype)                                  # bf16 store
    for b in range(B):
        out_ref[b, :, :] = out[:, b * M_img:(b + 1) * M_img]


@functools.lru_cache(maxsize=None)
def _tap_masks(H, W, B):
    """Host-built (9, B*H*W) f32 0/1 masks for the 3x3 taps (padding=1)."""
    hh, ww = np.divmod(np.arange(H * W), W)
    rows = []
    for dy in (-1, 0, 1):
        for dx in (-1, 0, 1):
            ok = ((hh + dy >= 0) & (hh + dy < H) &
                  (ww + dx >= 0) & (ww + dx < W))
            rows.append(ok)
    m = np.stack(rows, axis=0).astype(np.float32)                    # (9, H*W)
    return jnp.asarray(np.tile(m, (1, B)))                           # (9, B*H*W)


def fire_block(x_nchw, folded, *, is_residual=False, images_per_step=None):
    """NCHW f32 in / NCHW bf16 out.  Kernel works on (C, B*H*W) lane-merged slabs."""
    N, Cin, H, W = x_nchw.shape
    M = H * W
    S = folded["w_sq"].shape[0]
    Cout = folded["w_comb"].shape[0]
    if is_residual and Cin != Cout:
        raise ValueError("is_residual requires in_channels == expand_filters")

    # Default: whole batch in one grid step (best on single-TC v5e/v6e and fine
    # on v7x at these sizes).  On v7x, pass images_per_step = N // 2 to shard
    # the "parallel" grid axis over both TensorCores.
    B = N if images_per_step is None else images_per_step
    if B < 1 or N % B:
        raise ValueError("images_per_step must divide the batch size")
    G = N // B

    x = x_nchw.reshape(N, Cin, M)          # free (contiguous) reshape, stays f32
    masks = _tap_masks(H, W, B)            # (9, B*M) f32 constant

    full = lambda g: (0, 0)
    kernel = functools.partial(fire_kernel, W=W, is_residual=is_residual)

    out = pl.pallas_call(
        kernel,
        out_shape=jax.ShapeDtypeStruct((N, Cout, M), jnp.bfloat16),
        grid_spec=pltpu.PrefetchScalarGridSpec(
            num_scalar_prefetch=0,
            grid=(G,),
            in_specs=[
                pl.BlockSpec((B, Cin, M), lambda g: (g, 0, 0)),
                pl.BlockSpec((S, Cin), full),
                pl.BlockSpec((S, 1), full),
                pl.BlockSpec((Cout, 9 * S + 1), full),
                pl.BlockSpec((9, B * M), full),
            ],
            out_specs=pl.BlockSpec((B, Cout, M), lambda g: (g, 0, 0)),
        ),
        compiler_params=pltpu.CompilerParams(dimension_semantics=("parallel",)),
    )(x, folded["w_sq"], folded["b_sq"], folded["w_comb"], masks)

    return out.reshape(N, Cout, H, W)


def make_params(key, in_channels, squeeze_ratio, expand_filters, pct_3x3):
    """Deterministic synthetic parameters (FireBlock.__init__ shapes)."""
    s_1x1 = int(squeeze_ratio * expand_filters)
    e_3x3 = int(expand_filters * pct_3x3)
    e_1x1 = expand_filters - e_3x3
    keys = jax.random.split(key, 15)

    def bn(kg, kb, km, kv, c):
        gamma = 1.0 + 0.1 * jax.random.normal(kg, (c,), jnp.float32)
        beta = 0.1 * jax.random.normal(kb, (c,), jnp.float32)
        mean = 0.1 * jax.random.normal(km, (c,), jnp.float32)
        var = 0.5 + 0.5 * jnp.abs(jax.random.normal(kv, (c,), jnp.float32))
        scale = gamma / jnp.sqrt(var + BN_EPS)
        bias = beta - mean * scale
        return scale, bias

    w_sq = 0.1 * jax.random.normal(keys[0], (in_channels, s_1x1), jnp.float32)  # (Cin, S)
    w_e1 = 0.1 * jax.random.normal(keys[1], (s_1x1, e_1x1), jnp.float32)        # (S, E1)
    w_e3 = 0.1 * jax.random.normal(keys[2], (3, 3, s_1x1, e_3x3), jnp.float32)  # HWIO

    sq_scale, sq_bias = bn(*keys[3:7], s_1x1)
    e1_scale, e1_bias = bn(*keys[7:11], e_1x1)
    e3_scale, e3_bias = bn(*keys[11:15], e_3x3)
    return dict(w_sq=w_sq, w_e1=w_e1, w_e3=w_e3,
                sq_scale=sq_scale, sq_bias=sq_bias,
                e1_scale=e1_scale, e1_bias=e1_bias,
                e3_scale=e3_scale, e3_bias=e3_bias)


def fold_params(p):
    """Fold eval-mode BN scales into the conv weights, fuse expand_1x1 into the
    center-tap rows of the 3x3 im2col weight, fold the expand bias into an
    extra weight column (paired with a ones row in the patch matrix), and cast
    MXU operands to bf16."""
    w_sq, w_e1, w_e3 = p["w_sq"], p["w_e1"], p["w_e3"]
    Cin, S = w_sq.shape
    E1 = w_e1.shape[1]
    E3 = w_e3.shape[3]

    w_sq_f = (w_sq * p["sq_scale"][None, :]).T                       # (S, Cin)
    b_sq = p["sq_bias"].reshape(S, 1)

    w_e1_f = (w_e1 * p["e1_scale"][None, :]).T                       # (E1, S)
    w_e3_f = (w_e3 * p["e3_scale"][None, None, None, :])
    w_e3_f = w_e3_f.reshape(9 * S, E3).T                             # (E3, 9*S)
    b_comb = jnp.concatenate([p["e1_bias"], p["e3_bias"]])           # (E1+E3,)

    w_comb = jnp.zeros((E1 + E3, 9 * S + 1), jnp.float32)
    w_comb = w_comb.at[:E1, 4 * S:5 * S].set(w_e1_f)                 # center tap (ky=kx=1)
    w_comb = w_comb.at[E1:, :9 * S].set(w_e3_f)
    w_comb = w_comb.at[:, 9 * S].set(b_comb)                         # bias column

    return dict(w_sq=w_sq_f.astype(jnp.bfloat16), b_sq=b_sq,
                w_comb=w_comb.astype(jnp.bfloat16))


def fire_block_reference(x_nchw, fp, *, is_residual=False):
    """Plain-JAX reference consuming the SAME folded bf16 params as the kernel."""
    N, Cin, H, W = x_nchw.shape
    hp = jax.lax.Precision.HIGHEST
    x_f32 = x_nchw.astype(jnp.float32)
    x_mxu = x_f32.astype(jnp.bfloat16).astype(jnp.float32)           # MXU operand rounding

    w_sq = fp["w_sq"].astype(jnp.float32)                            # (S, Cin)
    S = w_sq.shape[0]
    sq = jnp.einsum("sc,nchw->nshw", w_sq, x_mxu, precision=hp) \
        + fp["b_sq"].reshape(1, S, 1, 1)
    sq = jnp.where(sq > 0, sq, NEG_SLOPE * sq)
    sq = sq.astype(jnp.bfloat16).astype(jnp.float32)                 # patch rounding

    sq_pad = jnp.pad(sq, ((0, 0), (0, 0), (1, 1), (1, 1)))
    taps = [sq_pad[:, :, ky:ky + H, kx:kx + W]
            for ky in range(3) for kx in range(3)]
    patches = jnp.concatenate(taps, axis=1)                          # (N, 9*S, H, W)

    w_cb = fp["w_comb"].astype(jnp.float32)                          # (Cout, 9*S+1)
    z = jnp.einsum("ok,nkhw->nohw", w_cb[:, :9 * S], patches, precision=hp) \
        + w_cb[:, 9 * S].reshape(1, -1, 1, 1)
    out = jnp.where(z > 0, z, NEG_SLOPE * z)
    if is_residual:
        out = out + x_f32
    return out


if __name__ == "__main__":
    # FireBlock(in_channels, squeeze_ratio=0.5, expand_filters=16, pct_3x3=0.5)
    root = jax.random.PRNGKey(0)

    configs = [
        # (in_channels, squeeze_ratio, expand_filters, pct_3x3, is_residual)
        (8, 0.5, 16, 0.5, False),
        (16, 0.5, 16, 0.5, True),     # residual branch (Cin == expand_filters)
    ]
    for idx, (cin, sr, ef, pct, resid) in enumerate(configs):
        kx, kp = jax.random.split(jax.random.fold_in(root, idx))
        # PyTorch-convention NCHW input: (batch=2, C, H=16, W=16)
        x_nchw = jax.random.normal(kx, (2, cin, 16, 16), jnp.float32)
        params = make_params(kp, cin, sr, ef, pct)
        folded = fold_params(params)

        out = jax.block_until_ready(fire_block(x_nchw, folded, is_residual=resid))
        ref = jax.block_until_ready(
            fire_block_reference(x_nchw, folded, is_residual=resid))

        assert out.shape == (2, ef, 16, 16), out.shape
        max_err = float(np.max(np.abs(np.asarray(out, np.float32)
                                      - np.asarray(ref, np.float32))))
        # bf16 output: bounded by half an ulp of the f32 reference (< 1e-2 here).
        assert max_err < 1e-2, f"config {idx}: mismatch vs reference: {max_err}"

    print("KERNEL_OK")
</pallas_src>

<mosaic_0001>
module attributes {stable_mosaic.version = 11 : i64} {
  func.func @fire_kernel(%arg0: i32, %arg1: memref<2x8x256xf32, #tpu.memory_space<vmem>>, %arg2: memref<8x8xbf16, #tpu.memory_space<vmem>>, %arg3: memref<8x1xf32, #tpu.memory_space<vmem>>, %arg4: memref<16x73xbf16, #tpu.memory_space<vmem>>, %arg5: memref<9x512xf32, #tpu.memory_space<vmem>>, %arg6: memref<2x16x256xbf16, #tpu.memory_space<vmem>>) attributes {dimension_semantics = [#tpu.dimension_semantics<parallel>], iteration_bounds = array<i64: 1>, scalar_prefetch = 0 : i64, scratch_operands = 0 : i64, tpu.core_type = #tpu.core_type<tc>, window_params = [{transform_indices = @transform_0, window_bounds = array<i64: 2, 8, 256>}, {pipeline_mode = #tpu.pipeline_mode<synchronous>, transform_indices = @transform_1, window_bounds = array<i64: 8, 8>}, {pipeline_mode = #tpu.pipeline_mode<synchronous>, transform_indices = @transform_2, window_bounds = array<i64: 8, 1>}, {pipeline_mode = #tpu.pipeline_mode<synchronous>, transform_indices = @transform_3, window_bounds = array<i64: 16, 73>}, {pipeline_mode = #tpu.pipeline_mode<synchronous>, transform_indices = @transform_4, window_bounds = array<i64: 9, 512>}, {transform_indices = @transform_5, window_bounds = array<i64: 2, 16, 256>}]} {
    %c0 = arith.constant 0 : index
    %c0_0 = arith.constant 0 : index
    %c0_1 = arith.constant 0 : index
    %0 = vector.load %arg1[%c0, %c0_0, %c0_1] : memref<2x8x256xf32, #tpu.memory_space<vmem>>, vector<1x8x256xf32>
    %1 = vector.shape_cast %0 : vector<1x8x256xf32> to vector<8x256xf32>
    %c1 = arith.constant 1 : index
    %c0_2 = arith.constant 0 : index
    %c0_3 = arith.constant 0 : index
    %2 = vector.load %arg1[%c1, %c0_2, %c0_3] : memref<2x8x256xf32, #tpu.memory_space<vmem>>, vector<1x8x256xf32>
    %3 = vector.shape_cast %2 : vector<1x8x256xf32> to vector<8x256xf32>
    %4 = tpu.concatenate %1, %3 in 1 : vector<8x256xf32>, vector<8x256xf32> -> vector<8x512xf32>
    %c0_4 = arith.constant 0 : index
    %c0_5 = arith.constant 0 : index
    %5 = vector.load %arg2[%c0_4, %c0_5] : memref<8x8xbf16, #tpu.memory_space<vmem>>, vector<8x8xbf16>
    %6 = arith.truncf %4 : vector<8x512xf32> to vector<8x512xbf16>
    %cst = arith.constant dense<0.000000e+00> : vector<8x512xf32>
    %7 = tpu.matmul %5, %6, %cst {dimension_numbers = #tpu.dot_dimension_numbers<[1], [0], [0], [1], [0, 0, 1, 1], [], []>} : vector<8x8xbf16>, vector<8x512xbf16>, vector<8x512xf32> -> vector<8x512xf32>
    %c0_6 = arith.constant 0 : index
    %c0_7 = arith.constant 0 : index
    %8 = vector.load %arg3[%c0_6, %c0_7] : memref<8x1xf32, #tpu.memory_space<vmem>>, vector<8x1xf32>
    %9 = vector.broadcast %8 : vector<8x1xf32> to vector<8x512xf32>
    %10 = arith.addf %7, %9 : vector<8x512xf32>
    %cst_8 = arith.constant 0.000000e+00 : f32
    %11 = vector.broadcast %cst_8 : f32 to vector<8x512xf32>
    %12 = arith.cmpf ogt, %10, %11 : vector<8x512xf32>
    %cst_9 = arith.constant 1.000000e-01 : f32
    %13 = vector.broadcast %cst_9 : f32 to vector<8x512xf32>
    %14 = arith.mulf %13, %10 : vector<8x512xf32>
    %15 = arith.select %12, %10, %14 : vector<8x512xi1>, vector<8x512xf32>
    %c17_i32 = arith.constant 17 : i32
    %16 = tpu.dynamic_rotate %15 by %c17_i32 dim 1 : vector<8x512xf32>, i32 -> vector<8x512xf32>
    %c0_10 = arith.constant 0 : index
    %c0_11 = arith.constant 0 : index
    %17 = vector.load %arg5[%c0_10, %c0_11] : memref<9x512xf32, #tpu.memory_space<vmem>>, vector<1x512xf32>
    %18 = vector.broadcast %17 : vector<1x512xf32> to vector<8x512xf32>
    %19 = arith.mulf %16, %18 : vector<8x512xf32>
    %c16_i32 = arith.constant 16 : i32
    %20 = tpu.dynamic_rotate %15 by %c16_i32 dim 1 : vector<8x512xf32>, i32 -> vector<8x512xf32>
    %c1_12 = arith.constant 1 : index
    %c0_13 = arith.constant 0 : index
    %21 = vector.load %arg5[%c1_12, %c0_13] : memref<9x512xf32, #tpu.memory_space<vmem>>, vector<1x512xf32>
    %22 = vector.broadcast %21 : vector<1x512xf32> to vector<8x512xf32>
    %23 = arith.mulf %20, %22 : vector<8x512xf32>
    %c15_i32 = arith.constant 15 : i32
    %24 = tpu.dynamic_rotate %15 by %c15_i32 dim 1 : vector<8x512xf32>, i32 -> vector<8x512xf32>
    %c2 = arith.constant 2 : index
    %c0_14 = arith.constant 0 : index
    %25 = vector.load %arg5[%c2, %c0_14] : memref<9x512xf32, #tpu.memory_space<vmem>>, vector<1x512xf32>
    %26 = vector.broadcast %25 : vector<1x512xf32> to vector<8x512xf32>
    %27 = arith.mulf %24, %26 : vector<8x512xf32>
    %c1_i32 = arith.constant 1 : i32
    %28 = tpu.dynamic_rotate %15 by %c1_i32 dim 1 : vector<8x512xf32>, i32 -> vector<8x512xf32>
    %c3 = arith.constant 3 : index
    %c0_15 = arith.constant 0 : index
    %29 = vector.load %arg5[%c3, %c0_15] : memref<9x512xf32, #tpu.memory_space<vmem>>, vector<1x512xf32>
    %30 = vector.broadcast %29 : vector<1x512xf32> to vector<8x512xf32>
    %31 = arith.mulf %28, %30 : vector<8x512xf32>
    %c511_i32 = arith.constant 511 : i32
    %32 = tpu.dynamic_rotate %15 by %c511_i32 dim 1 : vector<8x512xf32>, i32 -> vector<8x512xf32>
    %c5 = arith.constant 5 : index
    %c0_16 = arith.constant 0 : index
    %33 = vector.load %arg5[%c5, %c0_16] : memref<9x512xf32, #tpu.memory_space<vmem>>, vector<1x512xf32>
    %34 = vector.broadcast %33 : vector<1x512xf32> to vector<8x512xf32>
    %35 = arith.mulf %32, %34 : vector<8x512xf32>
    %c497_i32 = arith.constant 497 : i32
    %36 = tpu.dynamic_rotate %15 by %c497_i32 dim 1 : vector<8x512xf32>, i32 -> vector<8x512xf32>
    %c6 = arith.constant 6 : index
    %c0_17 = arith.constant 0 : index
    %37 = vector.load %arg5[%c6, %c0_17] : memref<9x512xf32, #tpu.memory_space<vmem>>, vector<1x512xf32>
    %38 = vector.broadcast %37 : vector<1x512xf32> to vector<8x512xf32>
    %39 = arith.mulf %36, %38 : vector<8x512xf32>
    %c496_i32 = arith.constant 496 : i32
    %40 = tpu.dynamic_rotate %15 by %c496_i32 dim 1 : vector<8x512xf32>, i32 -> vector<8x512xf32>
    %c7 = arith.constant 7 : index
    %c0_18 = arith.constant 0 : index
    %41 = vector.load %arg5[%c7, %c0_18] : memref<9x512xf32, #tpu.memory_space<vmem>>, vector<1x512xf32>
    %42 = vector.broadcast %41 : vector<1x512xf32> to vector<8x512xf32>
    %43 = arith.mulf %40, %42 : vector<8x512xf32>
    %c495_i32 = arith.constant 495 : i32
    %44 = tpu.dynamic_rotate %15 by %c495_i32 dim 1 : vector<8x512xf32>, i32 -> vector<8x512xf32>
    %c8 = arith.constant 8 : index
    %c0_19 = arith.constant 0 : index
    %45 = vector.load %arg5[%c8, %c0_19] : memref<9x512xf32, #tpu.memory_space<vmem>>, vector<1x512xf32>
    %46 = vector.broadcast %45 : vector<1x512xf32> to vector<8x512xf32>
    %47 = arith.mulf %44, %46 : vector<8x512xf32>
    %cst_20 = arith.constant 1.000000e+00 : f32
    %48 = vector.broadcast %cst_20 : f32 to vector<1x512xf32>
    %49 = tpu.concatenate %19, %23, %27, %31, %15, %35, %39, %43, %47, %48 in 0 : vector<8x512xf32>, vector<8x512xf32>, vector<8x512xf32>, vector<8x512xf32>, vector<8x512xf32>, vector<8x512xf32>, vector<8x512xf32>, vector<8x512xf32>, vector<8x512xf32>, vector<1x512xf32> -> vector<73x512xf32>
    %50 = arith.truncf %49 : vector<73x512xf32> to vector<73x512xbf16>
    %c0_21 = arith.constant 0 : index
    %c0_22 = arith.constant 0 : index
    %51 = vector.load %arg4[%c0_21, %c0_22] : memref<16x73xbf16, #tpu.memory_space<vmem>>, vector<16x73xbf16>
    %cst_23 = arith.constant dense<0.000000e+00> : vector<16x512xf32>
    %52 = tpu.matmul %51, %50, %cst_23 {dimension_numbers = #tpu.dot_dimension_numbers<[1], [0], [0], [1], [0, 0, 1, 1], [], []>} : vector<16x73xbf16>, vector<73x512xbf16>, vector<16x512xf32> -> vector<16x512xf32>
    %cst_24 = arith.constant 0.000000e+00 : f32
    %53 = vector.broadcast %cst_24 : f32 to vector<16x512xf32>
    %54 = arith.cmpf ogt, %52, %53 : vector<16x512xf32>
    %cst_25 = arith.constant 1.000000e-01 : f32
    %55 = vector.broadcast %cst_25 : f32 to vector<16x512xf32>
    %56 = arith.mulf %55, %52 : vector<16x512xf32>
    %57 = arith.select %54, %52, %56 : vector<16x512xi1>, vector<16x512xf32>
    %58 = arith.truncf %57 : vector<16x512xf32> to vector<16x512xbf16>
    %59 = vector.extract_strided_slice %58 {offsets = [0, 0], sizes = [16, 256], strides = [1, 1]} : vector<16x512xbf16> to vector<16x256xbf16>
    %c0_26 = arith.constant 0 : index
    %c0_27 = arith.constant 0 : index
    %c0_28 = arith.constant 0 : index
    %60 = vector.load %arg6[%c0_26, %c0_27, %c0_28] : memref<2x16x256xbf16, #tpu.memory_space<vmem>>, vector<1x16x256xbf16>
    %61 = vector.shape_cast %60 : vector<1x16x256xbf16> to vector<16x256xbf16>
    %62 = vector.shape_cast %59 : vector<16x256xbf16> to vector<1x16x256xbf16>
    tpu.vector_store %arg6[%c0_26, %c0_27, %c0_28], %62 {strides = array<i32>} : memref<2x16x256xbf16, #tpu.memory_space<vmem>>, vector<1x16x256xbf16>,
    %63 = vector.extract_strided_slice %58 {offsets = [0, 256], sizes = [16, 256], strides = [1, 1]} : vector<16x512xbf16> to vector<16x256xbf16>
    %c1_29 = arith.constant 1 : index
    %c0_30 = arith.constant 0 : index
    %c0_31 = arith.constant 0 : index
    %64 = vector.load %arg6[%c1_29, %c0_30, %c0_31] : memref<2x16x256xbf16, #tpu.memory_space<vmem>>, vector<1x16x256xbf16>
    %65 = vector.shape_cast %64 : vector<1x16x256xbf16> to vector<16x256xbf16>
    %66 = vector.shape_cast %63 : vector<16x256xbf16> to vector<1x16x256xbf16>
    tpu.vector_store %arg6[%c1_29, %c0_30, %c0_31], %66 {strides = array<i32>} : memref<2x16x256xbf16, #tpu.memory_space<vmem>>, vector<1x16x256xbf16>,
    return
  }
  func.func @transform_0(%arg0: i32) -> (i32, i32, i32) {
    %c0_i32 = arith.constant 0 : i32
    %c0_i32_0 = arith.constant 0 : i32
    %c0_i32_1 = arith.constant 0 : i32
    return %arg0, %c0_i32, %c0_i32_0 : i32, i32, i32
  }
  func.func @transform_1(%arg0: i32) -> (i32, i32) {
    %c0_i32 = arith.constant 0 : i32
    %c0_i32_0 = arith.constant 0 : i32
    %c0_i32_1 = arith.constant 0 : i32
    return %c0_i32, %c0_i32_0 : i32, i32
  }
  func.func @transform_2(%arg0: i32) -> (i32, i32) {
    %c0_i32 = arith.constant 0 : i32
    %c0_i32_0 = arith.constant 0 : i32
    %c0_i32_1 = arith.constant 0 : i32
    return %c0_i32, %c0_i32_0 : i32, i32
  }
  func.func @transform_3(%arg0: i32) -> (i32, i32) {
    %c0_i32 = arith.constant 0 : i32
    %c0_i32_0 = arith.constant 0 : i32
    %c0_i32_1 = arith.constant 0 : i32
    return %c0_i32, %c0_i32_0 : i32, i32
  }
  func.func @transform_4(%arg0: i32) -> (i32, i32) {
    %c0_i32 = arith.constant 0 : i32
    %c0_i32_0 = arith.constant 0 : i32
    %c0_i32_1 = arith.constant 0 : i32
    return %c0_i32, %c0_i32_0 : i32, i32
  }
  func.func @transform_5(%arg0: i32) -> (i32, i32, i32) {
    %c0_i32 = arith.constant 0 : i32
    %c0_i32_0 = arith.constant 0 : i32
    %c0_i32_1 = arith.constant 0 : i32
    return %arg0, %c0_i32, %c0_i32_0 : i32, i32, i32
  }
}

</mosaic_0001>

<llo_original>
// kernel: tpu_custom_call.1
$region0: #{tpu_custom_call.1}
  #allocation0 [shape = 'u32[]', space=smem, size = 0x4, offset = 0x4, fixed_abs, tag = 'smem constant byte address 0x4 - core index']
  #allocation1 [shape = 'u32[144,128]{1,0:T(1,128)}', space=vmem, size = 0x12000, scoped, tag = 'internal scratch']
  %s0 = inlined_call_operand.hbm [shape: f32[2,8,256], index: 0, kind: input, shape index: {}]
  %s1 = inlined_call_operand.vmem [shape: bf16[8,8], index: 1, kind: input, shape index: {}]
  %s2 = inlined_call_operand.vmem [shape: f32[8,1], index: 2, kind: input, shape index: {}]
  %s3 = inlined_call_operand.vmem [shape: bf16[16,73], index: 3, kind: input, shape index: {}]
  %s4 = inlined_call_operand.hbm [shape: f32[9,512], index: 4, kind: input, shape index: {}]
  %s5 = inlined_call_operand.hbm [shape: bf16[2,16,256], index: 5, kind: output, shape index: {}]
  %s6 = sld [smem:[#allocation0]]
  $region38: #{tpu_custom_call.1} parent=0
    _
  %s8 = ssub.s32 1, %s6
  %s9 = scalar_select 0, %s8, %s6
  $region1: #{tpu_custom_call.1} parent=0
    #allocation2 [shape = 'u8[16384]{0}', space=vmem, size = 0x4000, scoped, tag = 'input window, operand 0, single buffered']
    #allocation3 [shape = 's32[1]{0}', space=sflag, size = 0x4, scoped, tag = 'scoped memory for tpu_custom_call.1']
    #allocation4 [shape = 's32[1]{0}', space=sflag, size = 0x4, scoped, tag = 'scoped memory for tpu_custom_call.1']
    #allocation5 [shape = 'u8[32768]{0}', space=vmem, size = 0x8000, scoped, tag = 'input window, operand 4, single buffered']
    #allocation6 [shape = 's32[1]{0}', space=sflag, size = 0x4, scoped, tag = 'scoped memory for tpu_custom_call.1']
    #allocation7 [shape = 'u8[16384]{0}', space=vmem, size = 0x4000, scoped, tag = 'output window, operand 0, single buffered']
    %10 = vsyncpa [#allocation3], 0
    %11 = vsyncpa [#allocation6], 0
    %12 = vsyncpa [#allocation4], 0
    // Predicated region
    $region2: #{tpu_custom_call.1} parent=1 // pred_check
      _
    $region3: #{tpu_custom_call.1} parent=1 // pred_check_branch
      %14 = sbr.rel (0) target = $region5
    $region4: #{tpu_custom_call.1} parent=1 // pred_region
      %s16 = ssub.s32 512, 512
      %17 = vsyncadd [#allocation3], %s16
      %s18 = sshll.u32 [#allocation2], 4
      %s19 = int_to_ptr.vmem [resolvable:$true] %s18
      %24 = dma.hbm_to_vmem [thread:$0]  %s0, 512, %s19, [#allocation3], 256, 256, 16
    $region5: #{tpu_custom_call.1} parent=1 // pred_fallthru
      _
    // Predicated region
    $region6: #{tpu_custom_call.1} parent=1 // pred_check
      _
    $region7: #{tpu_custom_call.1} parent=1 // pred_check_branch
      %26 = sbr.rel (0) target = $region9
    $region8: #{tpu_custom_call.1} parent=1 // pred_region
      _
    $region9: #{tpu_custom_call.1} parent=1 // pred_fallthru
      _
    // Predicated region
    $region10: #{tpu_custom_call.1} parent=1 // pred_check
      _
    $region11: #{tpu_custom_call.1} parent=1 // pred_check_branch
      %28 = sbr.rel (0) target = $region13
    $region12: #{tpu_custom_call.1} parent=1 // pred_region
      _
    $region13: #{tpu_custom_call.1} parent=1 // pred_fallthru
      _
    // Predicated region
    $region14: #{tpu_custom_call.1} parent=1 // pred_check
      _
    $region15: #{tpu_custom_call.1} parent=1 // pred_check_branch
      %30 = sbr.rel (0) target = $region17
    $region16: #{tpu_custom_call.1} parent=1 // pred_region
      _
    $region17: #{tpu_custom_call.1} parent=1 // pred_fallthru
      _
    // Predicated region
    $region18: #{tpu_custom_call.1} parent=1 // pred_check
      _
    $region19: #{tpu_custom_call.1} parent=1 // pred_check_branch
      %32 = sbr.rel (0) target = $region21
    $region20: #{tpu_custom_call.1} parent=1 // pred_region
      %s34 = ssub.s32 1024, 1024
      %35 = vsyncadd [#allocation6], %s34
      %s36 = sshll.u32 [#allocation5], 4
      %s37 = int_to_ptr.vmem [resolvable:$true] %s36
      %42 = dma.hbm_to_vmem [thread:$0]  %s4, 1024, %s37, [#allocation6], 512, 512, 32
    $region21: #{tpu_custom_call.1} parent=1 // pred_fallthru
      _
    // Predicated region
    $region22: #{tpu_custom_call.1} parent=1 // pred_check
      _
    $region23: #{tpu_custom_call.1} parent=1 // pred_check_branch
      %44 = sbr.rel (0) target = $region25
    $region24: #{tpu_custom_call.1} parent=1 // pred_region
      %45 = dma.done [#allocation3], 512
    $region25: #{tpu_custom_call.1} parent=1 // pred_fallthru
      _
    // Predicated region
    $region26: #{tpu_custom_call.1} parent=1 // pred_check
      _
    $region27: #{tpu_custom_call.1} parent=1 // pred_check_branch
      %47 = sbr.rel (0) target = $region29
    $region28: #{tpu_custom_call.1} parent=1 // pred_region
      %48 = dma.done [#allocation6], 1024
    $region29: #{tpu_custom_call.1} parent=1 // pred_fallthru
      _
    %v50 = vld [vmem:[#allocation2] sm:$0xff]
    %v51 = vld [vmem:[#allocation2 + $0x8] sm:$0xff]
    %s52 = scalar_lea.vmem [#allocation2], 16
    %v53 = vld [vmem:[%s52] sm:$0xff]
    %v54 = vld [vmem:[%s52 + $0x8] sm:$0xff]
    %v55 = vld [vmem:[%s1] sm:$0xf]
    %v56 = vpack.c.bf16 %v50, %v50
    %v57 = vpack.c.bf16 %v51, %v51
    %v58 = vpack.c.bf16 %v53, %v53
    %v59 = vpack.c.bf16 %v54, %v54
    %v60 = vld [vmem:[%s2] sm:$0xff]
    %62 = vset.pattern.permute.xlu0 0
    %63 = vperm.xlu0 %62, %v60
    %v64 = vpop.permute.xlu0 %63
    %vm66 = vcmask 64512
    %v68 = vsel %vm66, %v55, 0
    %vm70 = vcmask 1043456
    %v72 = vsel %vm70, %v56, 0
    %v75 = vsel %vm70, %v57, 0
    %v78 = vsel %vm70, %v58, 0
    %v81 = vsel %vm70, %v59, 0
    %83 = vmatprep.subr.bf16.mxu0 %v75
    %84 = vmatpush1.bf16.msra.mxu0 %v72
    %85 = vmatprep.subr.bf16.mxu0 0
    %86 = vmatpush1.bf16.msra.mxu0 0
    %87 = vmatprep.subr.bf16.mxu0 0
    %88 = vmatpush1.bf16.msra.mxu0 0
    %89 = vmatprep.subr.bf16.mxu0 0
    %90 = vmatpush1.bf16.msra.mxu0 0
    %91 = vmatprep.subr.bf16.mxu0 0
    %92 = vmatpush1.bf16.msra.mxu0 0
    %93 = vmatprep.subr.bf16.mxu0 0
    %94 = vmatpush1.bf16.msra.mxu0 0
    %95 = vmatprep.subr.bf16.mxu0 0
    %96 = vmatpush1.bf16.msra.mxu0 0
    %97 = vmatprep.subr.bf16.mxu0 0
    %98 = vmatpush1.bf16.msra.mxu0 0
    %99 = vmatprep.subr.bf16.mxu0 0
    %100 = vmatpush1.bf16.msra.mxu0 0
    %101 = vmatprep.subr.bf16.mxu0 0
    %102 = vmatpush1.bf16.msra.mxu0 0
    %103 = vmatprep.subr.bf16.mxu0 0
    %104 = vmatpush1.bf16.msra.mxu0 0
    %105 = vmatprep.subr.bf16.mxu0 0
    %106 = vmatpush1.bf16.msra.mxu0 0
    %107 = vmatprep.subr.bf16.mxu0 0
    %108 = vmatpush1.bf16.msra.mxu0 0
    %109 = vmatprep.subr.bf16.mxu0 0
    %110 = vmatpush1.bf16.msra.mxu0 0
    %111 = vmatprep.subr.bf16.mxu0 0
    %112 = vmatpush1.bf16.msra.mxu0 0
    %113 = vmatprep.subr.bf16.mxu0 0
    %114 = vmatpush1.bf16.msra.mxu0 0
    %115 = vmatprep.mubr.bf16.mxu0 0
    %116 = vmatmul.mubr.bf16.gmra.mrb[0].mxu0 %v68
    %v117 = vpop.f32.mrb[0].mxu0
    %v118 = vadd.f32 %v64, %v117
    %v119 = vpop.f32.mrb[0].mxu0
    %v120 = vadd.f32 %v64, %v119
    %v121 = vpop.f32.mrb[0].mxu0
    %v122 = vpop.f32.mrb[0].mxu0
    %123 = vdwg.mxu0
    %124 = vmatprep.subr.bf16.mxu0 %v81
    %125 = vmatpush1.bf16.msra.mxu0 %v78
    %126 = vmatprep.subr.bf16.mxu0 0
    %127 = vmatpush1.bf16.msra.mxu0 0
    %128 = vmatprep.subr.bf16.mxu0 0
    %129 = vmatpush1.bf16.msra.mxu0 0
    %130 = vmatprep.subr.bf16.mxu0 0
    %131 = vmatpush1.bf16.msra.mxu0 0
    %132 = vmatprep.subr.bf16.mxu0 0
    %133 = vmatpush1.bf16.msra.mxu0 0
    %134 = vmatprep.subr.bf16.mxu0 0
    %135 = vmatpush1.bf16.msra.mxu0 0
    %136 = vmatprep.subr.bf16.mxu0 0
    %137 = vmatpush1.bf16.msra.mxu0 0
    %138 = vmatprep.subr.bf16.mxu0 0
    %139 = vmatpush1.bf16.msra.mxu0 0
    %140 = vmatprep.subr.bf16.mxu0 0
    %141 = vmatpush1.bf16.msra.mxu0 0
    %142 = vmatprep.subr.bf16.mxu0 0
    %143 = vmatpush1.bf16.msra.mxu0 0
    %144 = vmatprep.subr.bf16.mxu0 0
    %145 = vmatpush1.bf16.msra.mxu0 0
    %146 = vmatprep.subr.bf16.mxu0 0
    %147 = vmatpush1.bf16.msra.mxu0 0
    %148 = vmatprep.subr.bf16.mxu0 0
    %149 = vmatpush1.bf16.msra.mxu0 0
    %150 = vmatprep.subr.bf16.mxu0 0
    %151 = vmatpush1.bf16.msra.mxu0 0
    %152 = vmatprep.subr.bf16.mxu0 0
    %153 = vmatpush1.bf16.msra.mxu0 0
    %154 = vmatprep.subr.bf16.mxu0 0
    %155 = vmatpush1.bf16.msra.mxu0 0
    %156 = vmatprep.mubr.bf16.mxu0 0
    %157 = vmatmul.mubr.bf16.gmra.mrb[0].mxu0 %v68
    %v158 = vpop.f32.mrb[0].mxu0
    %v159 = vadd.f32 %v64, %v158
    %v160 = vpop.f32.mrb[0].mxu0
    %v161 = vadd.f32 %v64, %v160
    %v162 = vpop.f32.mrb[0].mxu0
    %v163 = vpop.f32.mrb[0].mxu0
    %164 = vdwg.mxu0
    %vm165 = vcmp.gt.f32.partialorder %v118, 0.0
    %vm166 = vcmp.gt.f32.partialorder %v120, 0.0
    %vm167 = vcmp.gt.f32.partialorder %v159, 0.0
    %vm168 = vcmp.gt.f32.partialorder %v161, 0.0
    %v169 = vmul.f32 %v118, 0.1
    %v170 = vmul.f32 %v120, 0.1
    %v171 = vmul.f32 %v159, 0.1
    %v172 = vmul.f32 %v161, 0.1
    %v173 = vsel %vm165, %v118, %v169
    %v174 = vsel %vm166, %v120, %v170
    %v175 = vsel %vm167, %v159, %v171
    %v176 = vsel %vm168, %v161, %v172
    %177 = vrot.lane.b32.xlu0 %v173, 17
    %v178 = vpop.permute.xlu0 %177
    %179 = vrot.lane.b32.xlu0 %v174, 17
    %v180 = vpop.permute.xlu0 %179
    %181 = vrot.lane.b32.xlu0 %v175, 17
    %v182 = vpop.permute.xlu0 %181
    %183 = vrot.lane.b32.xlu0 %v176, 17
    %v184 = vpop.permute.xlu0 %183
    %v185 = vlaneseq
    %v186 = vand.u32 %v185, 127
    %vm187 = vcmp.lt.s32.totalorder %v186, 17
    %v188 = vsel %vm187, %v182, %v184
    %v189 = vsel %vm187, %v180, %v182
    %v190 = vsel %vm187, %v178, %v180
    %v191 = vsel %vm187, %v184, %v178
    %v192 = vld [vmem:[#allocation5] ss:$8 sm:$0xf]
    %v194 = vlaneseq
    %v195 = vshrl.u32 %v194, 7
    %v196 = vsub.s32 0, %v195
    %v197 = vrot.slane %v192, %v196
    %v198 = vlaneseq
    %v199 = vshrl.u32 %v198, 7
    %v200 = vsub.s32 1, %v199
    %v201 = vrot.slane %v192, %v200
    %v202 = vlaneseq
    %v203 = vshrl.u32 %v202, 7
    %v204 = vsub.s32 2, %v203
    %v205 = vrot.slane %v192, %v204
    %v206 = vlaneseq
    %v207 = vshrl.u32 %v206, 7
    %v208 = vsub.s32 3, %v207
    %v209 = vrot.slane %v192, %v208
    %v214 = vmul.f32 %v191, %v197
    %v215 = vmul.f32 %v190, %v201
    %v216 = vmul.f32 %v189, %v205
    %v217 = vmul.f32 %v188, %v209
    %218 = vrot.lane.b32.xlu0 %v173, 16
    %v219 = vpop.permute.xlu0 %218
    %220 = vrot.lane.b32.xlu0 %v174, 16
    %v221 = vpop.permute.xlu0 %220
    %222 = vrot.lane.b32.xlu0 %v175, 16
    %v223 = vpop.permute.xlu0 %222
    %224 = vrot.lane.b32.xlu0 %v176, 16
    %v225 = vpop.permute.xlu0 %224
    %vm226 = vcmp.lt.s32.totalorder %v186, 16
    %v227 = vsel %vm226, %v223, %v225
    %v228 = vsel %vm226, %v221, %v223
    %v229 = vsel %vm226, %v219, %v221
    %v230 = vsel %vm226, %v225, %v219
    %s231 = scalar_lea.vmem [#allocation5], 1
    %v232 = vld [vmem:[%s231] ss:$8 sm:$0xf]
    %v234 = vlaneseq
    %v235 = vshrl.u32 %v234, 7
    %v236 = vsub.s32 0, %v235
    %v237 = vrot.slane %v232, %v236
    %v238 = vlaneseq
    %v239 = vshrl.u32 %v238, 7
    %v240 = vsub.s32 1, %v239
    %v241 = vrot.slane %v232, %v240
    %v242 = vlaneseq
    %v243 = vshrl.u32 %v242, 7
    %v244 = vsub.s32 2, %v243
    %v245 = vrot.slane %v232, %v244
    %v246 = vlaneseq
    %v247 = vshrl.u32 %v246, 7
    %v248 = vsub.s32 3, %v247
    %v249 = vrot.slane %v232, %v248
    %v254 = vmul.f32 %v230, %v237
    %v255 = vmul.f32 %v229, %v241
    %v256 = vmul.f32 %v228, %v245
    %v257 = vmul.f32 %v227, %v249
    %258 = vrot.lane.b32.xlu0 %v173, 15
    %v259 = vpop.permute.xlu0 %258
    %260 = vrot.lane.b32.xlu0 %v174, 15
    %v261 = vpop.permute.xlu0 %260
    %262 = vrot.lane.b32.xlu0 %v175, 15
    %v263 = vpop.permute.xlu0 %262
    %264 = vrot.lane.b32.xlu0 %v176, 15
    %v265 = vpop.permute.xlu0 %264
    %vm266 = vcmp.lt.s32.totalorder %v186, 15
    %v267 = vsel %vm266, %v263, %v265
    %v268 = vsel %vm266, %v261, %v263
    %v269 = vsel %vm266, %v259, %v261
    %v270 = vsel %vm266, %v265, %v259
    %s271 = scalar_lea.vmem [#allocation5], 2
    %v272 = vld [vmem:[%s271] ss:$8 sm:$0xf]
    %v274 = vlaneseq
    %v275 = vshrl.u32 %v274, 7
    %v276 = vsub.s32 0, %v275
    %v277 = vrot.slane %v272, %v276
    %v278 = vlaneseq
    %v279 = vshrl.u32 %v278, 7
    %v280 = vsub.s32 1, %v279
    %v281 = vrot.slane %v272, %v280
    %v282 = vlaneseq
    %v283 = vshrl.u32 %v282, 7
    %v284 = vsub.s32 2, %v283
    %v285 = vrot.slane %v272, %v284
    %v286 = vlaneseq
    %v287 = vshrl.u32 %v286, 7
    %v288 = vsub.s32 3, %v287
    %v289 = vrot.slane %v272, %v288
    %v294 = vmul.f32 %v270, %v277
    %v295 = vmul.f32 %v269, %v281
    %v296 = vmul.f32 %v268, %v285
    %v297 = vmul.f32 %v267, %v289
    %298 = vrot.lane.b32.xlu0 %v173, 1
    %v299 = vpop.permute.xlu0 %298
    %300 = vrot.lane.b32.xlu0 %v174, 1
    %v301 = vpop.permute.xlu0 %300
    %302 = vrot.lane.b32.xlu0 %v175, 1
    %v303 = vpop.permute.xlu0 %302
    %304 = vrot.lane.b32.xlu0 %v176, 1
    %v305 = vpop.permute.xlu0 %304
    %vm306 = vcmp.lt.s32.totalorder %v186, 1
    %v307 = vsel %vm306, %v303, %v305
    %v308 = vsel %vm306, %v301, %v303
    %v309 = vsel %vm306, %v299, %v301
    %v310 = vsel %vm306, %v305, %v299
    %s311 = scalar_lea.vmem [#allocation5], 3
    %v312 = vld [vmem:[%s311] ss:$8 sm:$0xf]
    %v314 = vlaneseq
    %v315 = vshrl.u32 %v314, 7
    %v316 = vsub.s32 0, %v315
    %v317 = vrot.slane %v312, %v316
    %v318 = vlaneseq
    %v319 = vshrl.u32 %v318, 7
    %v320 = vsub.s32 1, %v319
    %v321 = vrot.slane %v312, %v320
    %v322 = vlaneseq
    %v323 = vshrl.u32 %v322, 7
    %v324 = vsub.s32 2, %v323
    %v325 = vrot.slane %v312, %v324
    %v326 = vlaneseq
    %v327 = vshrl.u32 %v326, 7
    %v328 = vsub.s32 3, %v327
    %v329 = vrot.slane %v312, %v328
    %v334 = vmul.f32 %v310, %v317
    %v335 = vmul.f32 %v309, %v321
    %v336 = vmul.f32 %v308, %v325
    %v337 = vmul.f32 %v307, %v329
    %338 = vrot.lane.b32.xlu0 %v173, 127
    %v339 = vpop.permute.xlu0 %338
    %340 = vrot.lane.b32.xlu0 %v174, 127
    %v341 = vpop.permute.xlu0 %340
    %342 = vrot.lane.b32.xlu0 %v175, 127
    %v343 = vpop.permute.xlu0 %342
    %344 = vrot.lane.b32.xlu0 %v176, 127
    %v345 = vpop.permute.xlu0 %344
    %vm346 = vcmp.lt.s32.totalorder %v186, 127
    %v347 = vsel %vm346, %v343, %v345
    %v348 = vsel %vm346, %v341, %v343
    %v349 = vsel %vm346, %v339, %v341
    %v350 = vsel %vm346, %v345, %v339
    %s351 = scalar_lea.vmem [#allocation5], 5
    %v352 = vld [vmem:[%s351] ss:$8 sm:$0xf]
    %v354 = vlaneseq
    %v355 = vshrl.u32 %v354, 7
    %v356 = vsub.s32 0, %v355
    %v357 = vrot.slane %v352, %v356
    %v358 = vlaneseq
    %v359 = vshrl.u32 %v358, 7
    %v360 = vsub.s32 1, %v359
    %v361 = vrot.slane %v352, %v360
    %v362 = vlaneseq
    %v363 = vshrl.u32 %v362, 7
    %v364 = vsub.s32 2, %v363
    %v365 = vrot.slane %v352, %v364
    %v366 = vlaneseq
    %v367 = vshrl.u32 %v366, 7
    %v368 = vsub.s32 3, %v367
    %v369 = vrot.slane %v352, %v368
    %v374 = vmul.f32 %v349, %v357
    %v375 = vmul.f32 %v348, %v361
    %v376 = vmul.f32 %v347, %v365
    %v377 = vmul.f32 %v350, %v369
    %378 = vrot.lane.b32.xlu0 %v173, 113
    %v379 = vpop.permute.xlu0 %378
    %380 = vrot.lane.b32.xlu0 %v174, 113
    %v381 = vpop.permute.xlu0 %380
    %382 = vrot.lane.b32.xlu0 %v175, 113
    %v383 = vpop.permute.xlu0 %382
    %384 = vrot.lane.b32.xlu0 %v176, 113
    %v385 = vpop.permute.xlu0 %384
    %vm386 = vcmp.lt.s32.totalorder %v186, 113
    %v387 = vsel %vm386, %v383, %v385
    %v388 = vsel %vm386, %v381, %v383
    %v389 = vsel %vm386, %v379, %v381
    %v390 = vsel %vm386, %v385, %v379
    %s391 = scalar_lea.vmem [#allocation5], 6
    %v392 = vld [vmem:[%s391] ss:$8 sm:$0xf]
    %v394 = vlaneseq
    %v395 = vshrl.u32 %v394, 7
    %v396 = vsub.s32 0, %v395
    %v397 = vrot.slane %v392, %v396
    %v398 = vlaneseq
    %v399 = vshrl.u32 %v398, 7
    %v400 = vsub.s32 1, %v399
    %v401 = vrot.slane %v392, %v400
    %v402 = vlaneseq
    %v403 = vshrl.u32 %v402, 7
    %v404 = vsub.s32 2, %v403
    %v405 = vrot.slane %v392, %v404
    %v406 = vlaneseq
    %v407 = vshrl.u32 %v406, 7
    %v408 = vsub.s32 3, %v407
    %v409 = vrot.slane %v392, %v408
    %v414 = vmul.f32 %v389, %v397
    %v415 = vmul.f32 %v388, %v401
    %v416 = vmul.f32 %v387, %v405
    %v417 = vmul.f32 %v390, %v409
    %418 = vrot.lane.b32.xlu0 %v173, 112
    %v419 = vpop.permute.xlu0 %418
    %420 = vrot.lane.b32.xlu0 %v174, 112
    %v421 = vpop.permute.xlu0 %420
    %422 = vrot.lane.b32.xlu0 %v175, 112
    %v423 = vpop.permute.xlu0 %422
    %424 = vrot.lane.b32.xlu0 %v176, 112
    %v425 = vpop.permute.xlu0 %424
    %vm426 = vcmp.lt.s32.totalorder %v186, 112
    %v427 = vsel %vm426, %v423, %v425
    %v428 = vsel %vm426, %v421, %v423
    %v429 = vsel %vm426, %v419, %v421
    %v430 = vsel %vm426, %v425, %v419
    %s431 = scalar_lea.vmem [#allocation5], 7
    %v432 = vld [vmem:[%s431] ss:$8 sm:$0xf]
    %v434 = vlaneseq
    %v435 = vshrl.u32 %v434, 7
    %v436 = vsub.s32 0, %v435
    %v437 = vrot.slane %v432, %v436
    %v438 = vlaneseq
    %v439 = vshrl.u32 %v438, 7
    %v440 = vsub.s32 1, %v439
    %v441 = vrot.slane %v432, %v440
    %v442 = vlaneseq
    %v443 = vshrl.u32 %v442, 7
    %v444 = vsub.s32 2, %v443
    %v445 = vrot.slane %v432, %v444
    %v446 = vlaneseq
    %v447 = vshrl.u32 %v446, 7
    %v448 = vsub.s32 3, %v447
    %v449 = vrot.slane %v432, %v448
    %v454 = vmul.f32 %v429, %v437
    %v455 = vmul.f32 %v428, %v441
    %v456 = vmul.f32 %v427, %v445
    %v457 = vmul.f32 %v430, %v449
    %458 = vrot.lane.b32.xlu0 %v173, 111
    %v459 = vpop.permute.xlu0 %458
    %460 = vrot.lane.b32.xlu0 %v174, 111
    %v461 = vpop.permute.xlu0 %460
    %462 = vrot.lane.b32.xlu0 %v175, 111
    %v463 = vpop.permute.xlu0 %462
    %464 = vrot.lane.b32.xlu0 %v176, 111
    %v465 = vpop.permute.xlu0 %464
    %vm466 = vcmp.lt.s32.totalorder %v186, 111
    %v467 = vsel %vm466, %v463, %v465
    %v468 = vsel %vm466, %v461, %v463
    %v469 = vsel %vm466, %v459, %v461
    %v470 = vsel %vm466, %v465, %v459
    %s471 = scalar_lea.vmem [#allocation5], 32
    %v472 = vld [vmem:[%s471] ss:$8 sm:$0xf]
    %v474 = vlaneseq
    %v475 = vshrl.u32 %v474, 7
    %v476 = vsub.s32 0, %v475
    %v477 = vrot.slane %v472, %v476
    %v478 = vlaneseq
    %v479 = vshrl.u32 %v478, 7
    %v480 = vsub.s32 1, %v479
    %v481 = vrot.slane %v472, %v480
    %v482 = vlaneseq
    %v483 = vshrl.u32 %v482, 7
    %v484 = vsub.s32 2, %v483
    %v485 = vrot.slane %v472, %v484
    %v486 = vlaneseq
    %v487 = vshrl.u32 %v486, 7
    %v488 = vsub.s32 3, %v487
    %v489 = vrot.slane %v472, %v488
    %v494 = vmul.f32 %v469, %v477
    %v495 = vmul.f32 %v468, %v481
    %v496 = vmul.f32 %v467, %v485
    %v497 = vmul.f32 %v470, %v489
    %v498 = vpack.c.bf16 %v254, %v214
    %v499 = vpack.c.bf16 %v255, %v215
    %v500 = vpack.c.bf16 %v256, %v216
    %v501 = vpack.c.bf16 %v257, %v217
    %v502 = vpack.c.bf16 %v334, %v294
    %v503 = vpack.c.bf16 %v335, %v295
    %v504 = vpack.c.bf16 %v336, %v296
    %v505 = vpack.c.bf16 %v337, %v297
    %v506 = vpack.c.bf16 %v374, %v173
    %v507 = vpack.c.bf16 %v375, %v174
    %v508 = vpack.c.bf16 %v376, %v175
    %v509 = vpack.c.bf16 %v377, %v176
    %v510 = vpack.c.bf16 %v454, %v414
    %v511 = vpack.c.bf16 %v455, %v415
    %v512 = vpack.c.bf16 %v456, %v416
    %v513 = vpack.c.bf16 %v457, %v417
    %v514 = vpack.c.bf16 1.0, %v494
    %v515 = vpack.c.bf16 1.0, %v495
    %v516 = vpack.c.bf16 1.0, %v496
    %v517 = vpack.c.bf16 1.0, %v497
    %v518 = vld [vmem:[%s3] sm:$0xf]
    %v519 = vld [vmem:[%s3 + $0x4] sm:$0xf]
    %v522 = vunpack.c.l.b16 %v518
    %v523 = vunpack.c.l.b16 %v519
    %v524 = vpack.c.b16 %v523, %v522
    %vm525 = vcmask 596992
    %v527 = vsel %vm525, %v524, 0
    %vm529 = vcmask 1044480
    %v530 = vsel %vm70, 4294967295, 65535
    %v531 = vsel %vm529, %v530, 0
    %v533 = vand.u32 %v514, %v531
    %v536 = vand.u32 %v515, %v531
    %v539 = vand.u32 %v516, %v531
    %v542 = vand.u32 %v517, %v531
    %544 = vmatprep.subr.bf16.mxu0 %v499
    %545 = vmatpush1.bf16.msra.mxu0 %v498
    %546 = vmatprep.subr.bf16.mxu0 %v503
    %547 = vmatpush1.bf16.msra.mxu0 %v502
    %548 = vmatprep.subr.bf16.mxu0 %v507
    %549 = vmatpush1.bf16.msra.mxu0 %v506
    %550 = vmatprep.subr.bf16.mxu0 %v511
    %551 = vmatpush1.bf16.msra.mxu0 %v510
    %552 = vmatprep.subr.bf16.mxu0 %v536
    %553 = vmatpush1.bf16.msra.mxu0 %v533
    %554 = vmatprep.subr.bf16.mxu0 0
    %555 = vmatpush1.bf16.msra.mxu0 0
    %556 = vmatprep.subr.bf16.mxu0 0
    %557 = vmatpush1.bf16.msra.mxu0 0
    %558 = vmatprep.subr.bf16.mxu0 0
    %559 = vmatpush1.bf16.msra.mxu0 0
    %560 = vmatprep.subr.bf16.mxu0 0
    %561 = vmatpush1.bf16.msra.mxu0 0
    %562 = vmatprep.subr.bf16.mxu0 0
    %563 = vmatpush1.bf16.msra.mxu0 0
    %564 = vmatprep.subr.bf16.mxu0 0
    %565 = vmatpush1.bf16.msra.mxu0 0
    %566 = vmatprep.subr.bf16.mxu0 0
    %567 = vmatpush1.bf16.msra.mxu0 0
    %568 = vmatprep.subr.bf16.mxu0 0
    %569 = vmatpush1.bf16.msra.mxu0 0
    %570 = vmatprep.subr.bf16.mxu0 0
    %571 = vmatpush1.bf16.msra.mxu0 0
    %572 = vmatprep.subr.bf16.mxu0 0
    %573 = vmatpush1.bf16.msra.mxu0 0
    %574 = vmatprep.subr.bf16.mxu0 0
    %575 = vmatpush1.bf16.msra.mxu0 0
    %576 = vmatprep.mubr.bf16.mxu0 0
    %577 = vmatmul.mubr.bf16.gmra.mrb[0].mxu0 %v527
    %v578 = vpop.f32.mrb[0].mxu0
    %v579 = vadd.f32 0.0, %v578
    %v580 = vpop.f32.mrb[0].mxu0
    %v581 = vadd.f32 0.0, %v580
    %v582 = vpop.f32.mrb[0].mxu0
    %v583 = vadd.f32 0.0, %v582
    %v584 = vpop.f32.mrb[0].mxu0
    %v585 = vadd.f32 0.0, %v584
    %586 = vdwg.mxu0
    %587 = vmatprep.subr.bf16.mxu0 %v501
    %588 = vmatpush1.bf16.msra.mxu0 %v500
    %589 = vmatprep.subr.bf16.mxu0 %v505
    %590 = vmatpush1.bf16.msra.mxu0 %v504
    %591 = vmatprep.subr.bf16.mxu0 %v509
    %592 = vmatpush1.bf16.msra.mxu0 %v508
    %593 = vmatprep.subr.bf16.mxu0 %v513
    %594 = vmatpush1.bf16.msra.mxu0 %v512
    %595 = vmatprep.subr.bf16.mxu0 %v542
    %596 = vmatpush1.bf16.msra.mxu0 %v539
    %597 = vmatprep.subr.bf16.mxu0 0
    %598 = vmatpush1.bf16.msra.mxu0 0
    %599 = vmatprep.subr.bf16.mxu0 0
    %600 = vmatpush1.bf16.msra.mxu0 0
    %601 = vmatprep.subr.bf16.mxu0 0
    %602 = vmatpush1.bf16.msra.mxu0 0
    %603 = vmatprep.subr.bf16.mxu0 0
    %604 = vmatpush1.bf16.msra.mxu0 0
    %605 = vmatprep.subr.bf16.mxu0 0
    %606 = vmatpush1.bf16.msra.mxu0 0
    %607 = vmatprep.subr.bf16.mxu0 0
    %608 = vmatpush1.bf16.msra.mxu0 0
    %609 = vmatprep.subr.bf16.mxu0 0
    %610 = vmatpush1.bf16.msra.mxu0 0
    %611 = vmatprep.subr.bf16.mxu0 0
    %612 = vmatpush1.bf16.msra.mxu0 0
    %613 = vmatprep.subr.bf16.mxu0 0
    %614 = vmatpush1.bf16.msra.mxu0 0
    %615 = vmatprep.subr.bf16.mxu0 0
    %616 = vmatpush1.bf16.msra.mxu0 0
    %617 = vmatprep.subr.bf16.mxu0 0
    %618 = vmatpush1.bf16.msra.mxu0 0
    %619 = vmatprep.mubr.bf16.mxu0 0
    %620 = vmatmul.mubr.bf16.gmra.mrb[0].mxu0 %v527
    %v621 = vpop.f32.mrb[0].mxu0
    %v622 = vadd.f32 0.0, %v621
    %v623 = vpop.f32.mrb[0].mxu0
    %v624 = vadd.f32 0.0, %v623
    %v625 = vpop.f32.mrb[0].mxu0
    %v626 = vadd.f32 0.0, %v625
    %v627 = vpop.f32.mrb[0].mxu0
    %v628 = vadd.f32 0.0, %v627
    %629 = vdwg.mxu0
    %vm630 = vcmp.gt.f32.partialorder %v579, 0.0
    %vm631 = vcmp.gt.f32.partialorder %v581, 0.0
    %vm632 = vcmp.gt.f32.partialorder %v622, 0.0
    %vm633 = vcmp.gt.f32.partialorder %v624, 0.0
    %vm634 = vcmp.gt.f32.partialorder %v583, 0.0
    %vm635 = vcmp.gt.f32.partialorder %v585, 0.0
    %vm636 = vcmp.gt.f32.partialorder %v626, 0.0
    %vm637 = vcmp.gt.f32.partialorder %v628, 0.0
    %v638 = vmul.f32 %v579, 0.1
    %v639 = vmul.f32 %v581, 0.1
    %v640 = vmul.f32 %v622, 0.1
    %v641 = vmul.f32 %v624, 0.1
    %v642 = vmul.f32 %v583, 0.1
    %v643 = vmul.f32 %v585, 0.1
    %v644 = vmul.f32 %v626, 0.1
    %v645 = vmul.f32 %v628, 0.1
    %v646 = vsel %vm630, %v579, %v638
    %v647 = vsel %vm631, %v581, %v639
    %v648 = vsel %vm632, %v622, %v640
    %v649 = vsel %vm633, %v624, %v641
    %v650 = vsel %vm634, %v583, %v642
    %v651 = vsel %vm635, %v585, %v643
    %v652 = vsel %vm636, %v626, %v644
    %v653 = vsel %vm637, %v628, %v645
    %v654 = vpack.c.bf16 %v650, %v646
    %v655 = vpack.c.bf16 %v651, %v647
    %v656 = vpack.c.bf16 %v652, %v648
    %v657 = vpack.c.bf16 %v653, %v649
    %v660 = vunpack.c.l.b16 %v654
    %v661 = vunpack.c.l.b16 %v655
    %v662 = vunpack.c.h.b16 %v654
    %v663 = vunpack.c.h.b16 %v655
    %v664 = vpack.c.b16 %v661, %v660
    %v665 = vpack.c.b16 %v663, %v662
    %668 = vst [vmem:[#allocation7] sm:$0xff] %v664
    %669 = vst [vmem:[#allocation7 + $0x8] sm:$0xff] %v665
    %v672 = vunpack.c.l.b16 %v656
    %v673 = vunpack.c.l.b16 %v657
    %v674 = vunpack.c.h.b16 %v656
    %v675 = vunpack.c.h.b16 %v657
    %v676 = vpack.c.b16 %v673, %v672
    %v677 = vpack.c.b16 %v675, %v674
    %s680 = scalar_lea.vmem [#allocation7], 16
    %681 = vst [vmem:[%s680] sm:$0xff] %v676
    %682 = vst [vmem:[%s680 + $0x8] sm:$0xff] %v677
    // Predicated region
    $region30: #{tpu_custom_call.1} parent=1 // pred_check
      _
    $region31: #{tpu_custom_call.1} parent=1 // pred_check_branch
      %684 = sbr.rel (0) target = $region33
    $region32: #{tpu_custom_call.1} parent=1 // pred_region
      %s686 = ssub.s32 512, 512
      %687 = vsyncadd [#allocation4], %s686
      %s688 = sshll.u32 [#allocation7], 4
      %s689 = int_to_ptr.vmem [resolvable:$true] %s688
      %694 = dma.vmem_to_hbm [thread:$0]  %s689, 512, %s5, [#allocation4], 128, 128, 8
    $region33: #{tpu_custom_call.1} parent=1 // pred_fallthru
      _
    // Predicated region
    $region34: #{tpu_custom_call.1} parent=1 // pred_check
      _
    $region35: #{tpu_custom_call.1} parent=1 // pred_check_branch
      %696 = sbr.rel (0) target = $region37
    $region36: #{tpu_custom_call.1} parent=1 // pred_region
      %697 = dma.done [#allocation4], 512
    $region37: #{tpu_custom_call.1} parent=1 // pred_fallthru
      _
    %698 = vsyncpa [#allocation3], 1
    %699 = vsyncpa [#allocation6], 1
    %700 = vsyncpa [#allocation4], 1

</llo_original>
